<compile_context>
chip_gen: v7x
topology: tpu7x:2x2x1
jax: 0.10.0
libtpu: 0.0.40
codegen_flags: <defaults>
</compile_context>

<pallas_src>
import functools

import jax
import jax.numpy as jnp
from jax.experimental import pallas as pl
from jax.experimental.pallas import tpu as pltpu

_HIDDEN = 64   # per-head hidden width (matches the PyTorch module)
_HF = 128      # fused hidden width: actor lanes 0..63, critic lanes 64..127
_OUT = 128     # lane-dense output slab width


# ----------------------------------------------------------------------------
# Fused kernel: actor + (optional) critic, one launch, no per-tile selects.
# ----------------------------------------------------------------------------
def _fused_policy_kernel(x_ref, w1_ref, w2_ref, w3_ref, bias_ref, out_ref):
    x = x_ref[...]                                    # (TILE_B, S)

    b1 = bias_ref[0:1, :]                             # (1, 128)
    b2 = bias_ref[1:2, :]
    b3 = bias_ref[2:3, :]

    h1 = jnp.tanh(jnp.dot(x, w1_ref[...],
                          preferred_element_type=jnp.float32) + b1)
    h2 = jnp.tanh(jnp.dot(h1, w2_ref[...],
                          preferred_element_type=jnp.float32) + b2)
    # Lanes [0,A) = mean, lane A = value (zeros in REINFORCE mode), rest zero.
    out_ref[...] = jnp.dot(h2, w3_ref[...],
                           preferred_element_type=jnp.float32) + b3


# ----------------------------------------------------------------------------
# Parameter construction (mirrors Policy.__init__ / init_weights)
# ----------------------------------------------------------------------------
def init_policy_params(key, state_space, action_space, alghoritm="REINFORCE",
                       hidden=_HIDDEN):
    """normal_(weight), zeros_(bias), sigma = 0.5.  Weights stored (in, out)."""
    keys = jax.random.split(key, 6)
    p = {
        "w1": jax.random.normal(keys[0], (state_space, hidden), jnp.float32),
        "b1": jnp.zeros((1, hidden), jnp.float32),
        "w2": jax.random.normal(keys[1], (hidden, hidden), jnp.float32),
        "b2": jnp.zeros((1, hidden), jnp.float32),
        "w3": jax.random.normal(keys[2], (hidden, action_space), jnp.float32),
        "b3": jnp.zeros((1, action_space), jnp.float32),
        "sigma": jnp.full((action_space,), 0.5, jnp.float32),
    }
    if alghoritm == "AC":
        p.update({
            "wc1": jax.random.normal(keys[3], (state_space, hidden), jnp.float32),
            "bc1": jnp.zeros((1, hidden), jnp.float32),
            "wc2": jax.random.normal(keys[4], (hidden, hidden), jnp.float32),
            "bc2": jnp.zeros((1, hidden), jnp.float32),
            "wc3": jax.random.normal(keys[5], (hidden, 1), jnp.float32),
            "bc3": jnp.zeros((1, 1), jnp.float32),
        })
    return p


def fuse_policy_params(params, alghoritm="REINFORCE"):
    """One-time packing of all weights/biases into lane-dense slabs.

    NOTE: must be re-run whenever the underlying parameters change.
    """
    S, H = params["w1"].shape
    A = params["w3"].shape[1]
    assert A + 1 <= _OUT, "action_space too large for the 128-lane output slab"
    assert 2 * H <= _HF

    w1f = jnp.zeros((S, _HF), jnp.float32).at[:, :H].set(params["w1"])
    w2f = jnp.zeros((_HF, _HF), jnp.float32).at[:H, :H].set(params["w2"])
    w3f = jnp.zeros((_HF, _OUT), jnp.float32).at[:H, :A].set(params["w3"])

    bias = jnp.zeros((8, _OUT), jnp.float32)
    bias = bias.at[0, :H].set(params["b1"].reshape(-1))
    bias = bias.at[1, :H].set(params["b2"].reshape(-1))
    bias = bias.at[2, :A].set(params["b3"].reshape(-1))

    if alghoritm == "AC":
        w1f = w1f.at[:, H:2 * H].set(params["wc1"])
        w2f = w2f.at[H:2 * H, H:2 * H].set(params["wc2"])
        w3f = w3f.at[H:2 * H, A].set(params["wc3"].reshape(-1))
        bias = bias.at[0, H:2 * H].set(params["bc1"].reshape(-1))
        bias = bias.at[1, H:2 * H].set(params["bc2"].reshape(-1))
        bias = bias.at[2, A].set(params["bc3"][0, 0])

    return {"w1f": w1f, "w2f": w2f, "w3f": w3f, "bias": bias,
            "sigma_raw": params["sigma"]}


# ----------------------------------------------------------------------------
# Forward pass (single fused pallas_call, batch-gridded, no pad / no mask)
# ----------------------------------------------------------------------------
@functools.partial(jax.jit, static_argnames=("action_space", "alghoritm", "tile_b"))
def policy_forward(fused, x, action_space, alghoritm="REINFORCE", tile_b=2048):
    """REINFORCE: returns (mean, sigma).  AC: returns ((mean, sigma), value)."""
    B, S = x.shape
    A = action_space

    # --- batch tile sizing -------------------------------------------------
    # Cap TILE_B by a VMEM budget for the streamed, double-buffered x / out
    # blocks so the kernel stays safe even for large state spaces (v7x has
    # only 64 MiB physical VMEM, 32 MiB scoped default).
    stream_budget = 20 << 20                       # bytes for streamed buffers
    per_row = 2 * (S + _OUT) * 4                   # 2 bufs * (x row + out row)
    tb_cap = max(8, (stream_budget // per_row) // 8 * 8)

    b8 = -(-B // 8) * 8                            # batch rounded up to sublane
    TILE_B = min(tile_b, tb_cap, max(8, b8))
    TILE_B = max(8, (TILE_B // 8) * 8)

    # Guarantee >= 2 grid steps for moderate batches so v7x's two TensorCores
    # both get work (dimension_semantics=("parallel",)).  Costs one extra
    # ~0.35us grid step on single-core chips — negligible.
    if pl.cdiv(B, TILE_B) == 1 and B >= 16:
        half = -(-B // 2)
        TILE_B = max(8, ((half + 7) // 8) * 8)

    grid = (pl.cdiv(B, TILE_B),)

    # Scoped-VMEM limit: streamed buffers + (double-buffered) weight slabs.
    weight_bytes = 2 * (S * _HF + _HF * _HF + _HF * _OUT + 8 * _OUT) * 4
    need = 2 * TILE_B * (S + _OUT) * 4 + weight_bytes
    vmem_limit = int(min(max(need + (8 << 20), 32 << 20), 56 << 20))

    out = pl.pallas_call(
        _fused_policy_kernel,
        out_shape=jax.ShapeDtypeStruct((B, _OUT), jnp.float32),
        grid=grid,
        in_specs=[
            pl.BlockSpec((TILE_B, S), lambda i: (i, 0)),   # x streams (ragged
                                                           # last block is OK:
                                                           # rows are indep.)
            pl.BlockSpec((S, _HF), lambda i: (0, 0)),      # weights resident
            pl.BlockSpec((_HF, _HF), lambda i: (0, 0)),
            pl.BlockSpec((_HF, _OUT), lambda i: (0, 0)),
            pl.BlockSpec((8, _OUT), lambda i: (0, 0)),     # bias slab
        ],
        out_specs=pl.BlockSpec((TILE_B, _OUT), lambda i: (i, 0)),
        compiler_params=pltpu.CompilerParams(
            dimension_semantics=("parallel",),             # megacore on v7x
            vmem_limit_bytes=vmem_limit),
    )(x, fused["w1f"], fused["w2f"], fused["w3f"], fused["bias"])

    mean = out[:, :A]
    # Sigma is batch-independent: computed in plain XLA, outside the kernel.
    sigma = jax.nn.softplus(fused["sigma_raw"]).reshape(-1)
    if alghoritm == "AC":
        value = out[:, A:A + 1]
        return (mean, sigma), value
    return mean, sigma


# ----------------------------------------------------------------------------
# Reference (plain JAX) for verification
# ----------------------------------------------------------------------------
def _ref_forward(params, x, alghoritm):
    h1 = jnp.tanh(x @ params["w1"] + params["b1"])
    h2 = jnp.tanh(h1 @ params["w2"] + params["b2"])
    mean = h2 @ params["w3"] + params["b3"]
    sigma = jax.nn.softplus(params["sigma"]).reshape(-1)
    if alghoritm == "AC":
        c1 = jnp.tanh(x @ params["wc1"] + params["bc1"])
        c2 = jnp.tanh(c1 @ params["wc2"] + params["bc2"])
        value = c2 @ params["wc3"] + params["bc3"]
        return (mean, sigma), value
    return mean, sigma


if __name__ == "__main__":
    import numpy as np

    B, S, A = 2, 8, 4          # batch, state_space, action_space (hidden = 64)
    key = jax.random.PRNGKey(0)
    kx, kp = jax.random.split(key)
    x = jax.random.normal(kx, (B, S), jnp.float32)

    # --- REINFORCE (actor only) ---
    params = init_policy_params(kp, S, A, alghoritm="REINFORCE")
    fused = fuse_policy_params(params, alghoritm="REINFORCE")
    mean, sigma = policy_forward(fused, x, action_space=A, alghoritm="REINFORCE")
    jax.block_until_ready((mean, sigma))
    ref_mean, ref_sigma = _ref_forward(params, x, "REINFORCE")
    np.testing.assert_allclose(np.asarray(mean), np.asarray(ref_mean),
                               rtol=1e-5, atol=1e-5)
    np.testing.assert_allclose(np.asarray(sigma), np.asarray(ref_sigma),
                               rtol=1e-6, atol=1e-6)

    # --- AC (actor + critic, fused in the same single kernel launch) ---
    params_ac = init_policy_params(kp, S, A, alghoritm="AC")
    fused_ac = fuse_policy_params(params_ac, alghoritm="AC")
    (mean_ac, sigma_ac), value = policy_forward(fused_ac, x, action_space=A,
                                                alghoritm="AC")
    jax.block_until_ready((mean_ac, sigma_ac, value))
    (ref_mean_ac, ref_sigma_ac), ref_value = _ref_forward(params_ac, x, "AC")
    np.testing.assert_allclose(np.asarray(mean_ac), np.asarray(ref_mean_ac),
                               rtol=1e-5, atol=1e-5)
    np.testing.assert_allclose(np.asarray(sigma_ac), np.asarray(ref_sigma_ac),
                               rtol=1e-6, atol=1e-6)
    np.testing.assert_allclose(np.asarray(value), np.asarray(ref_value),
                               rtol=1e-5, atol=1e-5)

    print("KERNEL_OK")
</pallas_src>

<mosaic_0001>
module attributes {stable_mosaic.version = 11 : i64} {
  func.func @_fused_policy_kernel(%arg0: i32, %arg1: memref<8x8xf32, #tpu.memory_space<vmem>>, %arg2: memref<8x128xf32, #tpu.memory_space<vmem>>, %arg3: memref<128x128xf32, #tpu.memory_space<vmem>>, %arg4: memref<128x128xf32, #tpu.memory_space<vmem>>, %arg5: memref<8x128xf32, #tpu.memory_space<vmem>>, %arg6: memref<8x128xf32, #tpu.memory_space<vmem>>) attributes {dimension_semantics = [#tpu.dimension_semantics<parallel>], iteration_bounds = array<i64: 1>, scalar_prefetch = 0 : i64, scratch_operands = 0 : i64, tpu.core_type = #tpu.core_type<tc>, window_params = [{transform_indices = @transform_0, window_bounds = array<i64: 8, 8>}, {pipeline_mode = #tpu.pipeline_mode<synchronous>, transform_indices = @transform_1, window_bounds = array<i64: 8, 128>}, {pipeline_mode = #tpu.pipeline_mode<synchronous>, transform_indices = @transform_2, window_bounds = array<i64: 128, 128>}, {pipeline_mode = #tpu.pipeline_mode<synchronous>, transform_indices = @transform_3, window_bounds = array<i64: 128, 128>}, {pipeline_mode = #tpu.pipeline_mode<synchronous>, transform_indices = @transform_4, window_bounds = array<i64: 8, 128>}, {transform_indices = @transform_5, window_bounds = array<i64: 8, 128>}]} {
    %c0 = arith.constant 0 : index
    %c0_0 = arith.constant 0 : index
    %0 = vector.load %arg1[%c0, %c0_0] : memref<8x8xf32, #tpu.memory_space<vmem>>, vector<8x8xf32>
    %c0_1 = arith.constant 0 : index
    %c0_2 = arith.constant 0 : index
    %1 = vector.load %arg5[%c0_1, %c0_2] : memref<8x128xf32, #tpu.memory_space<vmem>>, vector<1x128xf32>
    %c1 = arith.constant 1 : index
    %c0_3 = arith.constant 0 : index
    %2 = vector.load %arg5[%c1, %c0_3] : memref<8x128xf32, #tpu.memory_space<vmem>>, vector<1x128xf32>
    %c2 = arith.constant 2 : index
    %c0_4 = arith.constant 0 : index
    %3 = vector.load %arg5[%c2, %c0_4] : memref<8x128xf32, #tpu.memory_space<vmem>>, vector<1x128xf32>
    %c0_5 = arith.constant 0 : index
    %c0_6 = arith.constant 0 : index
    %4 = vector.load %arg2[%c0_5, %c0_6] : memref<8x128xf32, #tpu.memory_space<vmem>>, vector<8x128xf32>
    %cst = arith.constant dense<0.000000e+00> : vector<8x128xf32>
    %5 = tpu.matmul %0, %4, %cst {dimension_numbers = #tpu.dot_dimension_numbers<[1], [0], [0], [1], [0, 0, 1, 1], [], []>} : vector<8x8xf32>, vector<8x128xf32>, vector<8x128xf32> -> vector<8x128xf32>
    %6 = vector.broadcast %1 : vector<1x128xf32> to vector<8x128xf32>
    %7 = arith.addf %5, %6 : vector<8x128xf32>
    %8 = math.tanh %7 : vector<8x128xf32>
    %c0_7 = arith.constant 0 : index
    %c0_8 = arith.constant 0 : index
    %9 = vector.load %arg3[%c0_7, %c0_8] : memref<128x128xf32, #tpu.memory_space<vmem>>, vector<128x128xf32>
    %cst_9 = arith.constant dense<0.000000e+00> : vector<8x128xf32>
    %10 = tpu.matmul %8, %9, %cst_9 {dimension_numbers = #tpu.dot_dimension_numbers<[1], [0], [0], [1], [0, 0, 1, 1], [], []>} : vector<8x128xf32>, vector<128x128xf32>, vector<8x128xf32> -> vector<8x128xf32>
    %11 = vector.broadcast %2 : vector<1x128xf32> to vector<8x128xf32>
    %12 = arith.addf %10, %11 : vector<8x128xf32>
    %13 = math.tanh %12 : vector<8x128xf32>
    %c0_10 = arith.constant 0 : index
    %c0_11 = arith.constant 0 : index
    %14 = vector.load %arg4[%c0_10, %c0_11] : memref<128x128xf32, #tpu.memory_space<vmem>>, vector<128x128xf32>
    %cst_12 = arith.constant dense<0.000000e+00> : vector<8x128xf32>
    %15 = tpu.matmul %13, %14, %cst_12 {dimension_numbers = #tpu.dot_dimension_numbers<[1], [0], [0], [1], [0, 0, 1, 1], [], []>} : vector<8x128xf32>, vector<128x128xf32>, vector<8x128xf32> -> vector<8x128xf32>
    %16 = vector.broadcast %3 : vector<1x128xf32> to vector<8x128xf32>
    %17 = arith.addf %15, %16 : vector<8x128xf32>
    %c0_13 = arith.constant 0 : index
    %c0_14 = arith.constant 0 : index
    %18 = vector.load %arg6[%c0_13, %c0_14] : memref<8x128xf32, #tpu.memory_space<vmem>>, vector<8x128xf32>
    tpu.vector_store %arg6[%c0_13, %c0_14], %17 {strides = array<i32>} : memref<8x128xf32, #tpu.memory_space<vmem>>, vector<8x128xf32>,
    return
  }
  func.func @transform_0(%arg0: i32) -> (i32, i32) {
    %c0_i32 = arith.constant 0 : i32
    %c0_i32_0 = arith.constant 0 : i32
    return %arg0, %c0_i32 : i32, i32
  }
  func.func @transform_1(%arg0: i32) -> (i32, i32) {
    %c0_i32 = arith.constant 0 : i32
    %c0_i32_0 = arith.constant 0 : i32
    %c0_i32_1 = arith.constant 0 : i32
    return %c0_i32, %c0_i32_0 : i32, i32
  }
  func.func @transform_2(%arg0: i32) -> (i32, i32) {
    %c0_i32 = arith.constant 0 : i32
    %c0_i32_0 = arith.constant 0 : i32
    %c0_i32_1 = arith.constant 0 : i32
    return %c0_i32, %c0_i32_0 : i32, i32
  }
  func.func @transform_3(%arg0: i32) -> (i32, i32) {
    %c0_i32 = arith.constant 0 : i32
    %c0_i32_0 = arith.constant 0 : i32
    %c0_i32_1 = arith.constant 0 : i32
    return %c0_i32, %c0_i32_0 : i32, i32
  }
  func.func @transform_4(%arg0: i32) -> (i32, i32) {
    %c0_i32 = arith.constant 0 : i32
    %c0_i32_0 = arith.constant 0 : i32
    %c0_i32_1 = arith.constant 0 : i32
    return %c0_i32, %c0_i32_0 : i32, i32
  }
  func.func @transform_5(%arg0: i32) -> (i32, i32) {
    %c0_i32 = arith.constant 0 : i32
    %c0_i32_0 = arith.constant 0 : i32
    return %arg0, %c0_i32 : i32, i32
  }
}

</mosaic_0001>

<llo_original>
// kernel: policy_forward.1
$region0: #{policy_forward.1}
  #allocation0 [shape = 'u32[]', space=smem, size = 0x4, offset = 0x4, fixed_abs, tag = 'smem constant byte address 0x4 - core index']
  #allocation1 [shape = 'u32[144,128]{1,0:T(1,128)}', space=vmem, size = 0x12000, scoped, tag = 'internal scratch']
  %s0 = inlined_call_operand.vmem [shape: f32[2,8], index: 0, kind: input, shape index: {}]
  %s1 = inlined_call_operand.vmem [shape: f32[8,128], index: 1, kind: input, shape index: {}]
  %s2 = inlined_call_operand.hbm [shape: f32[128,128], index: 2, kind: input, shape index: {}]
  %s3 = inlined_call_operand.hbm [shape: f32[128,128], index: 3, kind: input, shape index: {}]
  %s4 = inlined_call_operand.hbm [shape: f32[8,128], index: 4, kind: input, shape index: {}]
  %s5 = inlined_call_operand.hbm [shape: f32[2,128], index: 5, kind: output, shape index: {}]
  %s6 = sld [smem:[#allocation0]]
  $region42: #{policy_forward.1} parent=0
    _
  %s8 = ssub.s32 1, %s6
  %s9 = scalar_select 0, %s8, %s6
  $region1: #{policy_forward.1} parent=0
    #allocation2 [shape = 'u8[65536]{0}', space=vmem, size = 0x10000, scoped, tag = 'input window, operand 2, single buffered']
    #allocation3 [shape = 's32[1]{0}', space=sflag, size = 0x4, scoped, tag = 'scoped memory for policy_forward.1']
    #allocation4 [shape = 's32[1]{0}', space=sflag, size = 0x4, scoped, tag = 'scoped memory for policy_forward.1']
    #allocation5 [shape = 'u8[65536]{0}', space=vmem, size = 0x10000, scoped, tag = 'input window, operand 3, single buffered']
    #allocation6 [shape = 's32[1]{0}', space=sflag, size = 0x4, scoped, tag = 'scoped memory for policy_forward.1']
    #allocation7 [shape = 'u8[4096]{0}', space=vmem, size = 0x1000, scoped, tag = 'input window, operand 4, single buffered']
    #allocation8 [shape = 'u8[4096]{0}', space=vmem, size = 0x1000, scoped, tag = 'output window, operand 0, single buffered']
    %10 = vsyncpa [#allocation3], 0
    %11 = vsyncpa [#allocation6], 0
    %12 = vsyncpa [#allocation4], 0
    // Predicated region
    $region2: #{policy_forward.1} parent=1 // pred_check
      _
    $region3: #{policy_forward.1} parent=1 // pred_check_branch
      %14 = sbr.rel (0) target = $region5
    $region4: #{policy_forward.1} parent=1 // pred_region
      _
    $region5: #{policy_forward.1} parent=1 // pred_fallthru
      _
    // Predicated region
    $region6: #{policy_forward.1} parent=1 // pred_check
      _
    $region7: #{policy_forward.1} parent=1 // pred_check_branch
      %16 = sbr.rel (0) target = $region9
    $region8: #{policy_forward.1} parent=1 // pred_region
      _
    $region9: #{policy_forward.1} parent=1 // pred_fallthru
      _
    // Predicated region
    $region10: #{policy_forward.1} parent=1 // pred_check
      _
    $region11: #{policy_forward.1} parent=1 // pred_check_branch
      %18 = sbr.rel (0) target = $region13
    $region12: #{policy_forward.1} parent=1 // pred_region
      %s20 = ssub.s32 2048, 2048
      %21 = vsyncadd [#allocation3], %s20
      %s22 = sshll.u32 [#allocation2], 4
      %s23 = int_to_ptr.vmem [resolvable:$true] %s22
      %28 = dma.hbm_to_vmem [thread:$0]  %s2, 2048, %s23, [#allocation3], 128, 128, 8
    $region13: #{policy_forward.1} parent=1 // pred_fallthru
      _
    // Predicated region
    $region14: #{policy_forward.1} parent=1 // pred_check
      _
    $region15: #{policy_forward.1} parent=1 // pred_check_branch
      %30 = sbr.rel (0) target = $region17
    $region16: #{policy_forward.1} parent=1 // pred_region
      %s32 = ssub.s32 2048, 2048
      %33 = vsyncadd [#allocation6], %s32
      %s34 = sshll.u32 [#allocation5], 4
      %s35 = int_to_ptr.vmem [resolvable:$true] %s34
      %40 = dma.hbm_to_vmem [thread:$0]  %s3, 2048, %s35, [#allocation6], 128, 128, 8
    $region17: #{policy_forward.1} parent=1 // pred_fallthru
      _
    // Predicated region
    $region18: #{policy_forward.1} parent=1 // pred_check
      _
    $region19: #{policy_forward.1} parent=1 // pred_check_branch
      %42 = sbr.rel (0) target = $region21
    $region20: #{policy_forward.1} parent=1 // pred_region
      %s44 = ssub.s32 128, 128
      %45 = vsyncadd [#allocation6], %s44
      %s47 = sshll.u32 [#allocation7], 4
      %s48 = int_to_ptr.vmem [resolvable:$true] %s47
      %50 = dma.hbm_to_vmem [thread:$0]  %s4, 128, %s48, [#allocation6]
    $region21: #{policy_forward.1} parent=1 // pred_fallthru
      _
    // Predicated region
    $region22: #{policy_forward.1} parent=1 // pred_check
      _
    $region23: #{policy_forward.1} parent=1 // pred_check_branch
      %52 = sbr.rel (0) target = $region25
    $region24: #{policy_forward.1} parent=1 // pred_region
      %53 = dma.done [#allocation3], 2048
    $region25: #{policy_forward.1} parent=1 // pred_fallthru
      _
    // Predicated region
    $region26: #{policy_forward.1} parent=1 // pred_check
      _
    $region27: #{policy_forward.1} parent=1 // pred_check_branch
      %55 = sbr.rel (0) target = $region29
    $region28: #{policy_forward.1} parent=1 // pred_region
      %56 = dma.done [#allocation6], 2048
    $region29: #{policy_forward.1} parent=1 // pred_fallthru
      _
    // Predicated region
    $region30: #{policy_forward.1} parent=1 // pred_check
      _
    $region31: #{policy_forward.1} parent=1 // pred_check_branch
      %58 = sbr.rel (0) target = $region33
    $region32: #{policy_forward.1} parent=1 // pred_region
      %59 = dma.done [#allocation6], 128
    $region33: #{policy_forward.1} parent=1 // pred_fallthru
      _
    %v60 = vld [vmem:[%s0] sm:$0xff]
    %v61 = vld [vmem:[#allocation7] sm:$0x1]
    %v62 = vld [vmem:[#allocation7 + $0x1] sm:$0x1]
    %v63 = vld [vmem:[#allocation7 + $0x2] sm:$0x1]
    %v64 = vld [vmem:[%s1] sm:$0xff]
    %v65 = vlaneseq
    %v66 = vshrl.u32 %v65, 7
    %v67 = vsub.s32 0, %v66
    %v68 = vrot.slane %v61, %v67
    %vm69 = vcmask 64512
    %v71 = vsel %vm69, %v60, 0
    %73 = vmatprep.subr.mxu0 0.0
    %74 = vmatpush1.msra.mxu0 %v64
    %75 = vmatprep.subr.mxu0 0.0
    %76 = vmatpush1.msra.mxu0 0.0
    %77 = vmatprep.subr.mxu0 0.0
    %78 = vmatpush1.msra.mxu0 0.0
    %79 = vmatprep.subr.mxu0 0.0
    %80 = vmatpush1.msra.mxu0 0.0
    %81 = vmatprep.subr.mxu0 0.0
    %82 = vmatpush1.msra.mxu0 0.0
    %83 = vmatprep.subr.mxu0 0.0
    %84 = vmatpush1.msra.mxu0 0.0
    %85 = vmatprep.subr.mxu0 0.0
    %86 = vmatpush1.msra.mxu0 0.0
    %87 = vmatprep.subr.mxu0 0.0
    %88 = vmatpush1.msra.mxu0 0.0
    %89 = vmatprep.subr.mxu0 0.0
    %90 = vmatpush1.msra.mxu0 0.0
    %91 = vmatprep.subr.mxu0 0.0
    %92 = vmatpush1.msra.mxu0 0.0
    %93 = vmatprep.subr.mxu0 0.0
    %94 = vmatpush1.msra.mxu0 0.0
    %95 = vmatprep.subr.mxu0 0.0
    %96 = vmatpush1.msra.mxu0 0.0
    %97 = vmatprep.subr.mxu0 0.0
    %98 = vmatpush1.msra.mxu0 0.0
    %99 = vmatprep.subr.mxu0 0.0
    %100 = vmatpush1.msra.mxu0 0.0
    %101 = vmatprep.subr.mxu0 0.0
    %102 = vmatpush1.msra.mxu0 0.0
    %103 = vmatprep.subr.mxu0 0.0
    %104 = vmatpush1.msra.mxu0 0.0
    %105 = vmatprep.subr.mxu0 0.0
    %106 = vmatpush1.msra.mxu0 0.0
    %107 = vmatprep.subr.mxu0 0.0
    %108 = vmatpush1.msra.mxu0 0.0
    %109 = vmatprep.subr.mxu0 0.0
    %110 = vmatpush1.msra.mxu0 0.0
    %111 = vmatprep.subr.mxu0 0.0
    %112 = vmatpush1.msra.mxu0 0.0
    %113 = vmatprep.subr.mxu0 0.0
    %114 = vmatpush1.msra.mxu0 0.0
    %115 = vmatprep.subr.mxu0 0.0
    %116 = vmatpush1.msra.mxu0 0.0
    %117 = vmatprep.subr.mxu0 0.0
    %118 = vmatpush1.msra.mxu0 0.0
    %119 = vmatprep.subr.mxu0 0.0
    %120 = vmatpush1.msra.mxu0 0.0
    %121 = vmatprep.subr.mxu0 0.0
    %122 = vmatpush1.msra.mxu0 0.0
    %123 = vmatprep.subr.mxu0 0.0
    %124 = vmatpush1.msra.mxu0 0.0
    %125 = vmatprep.subr.mxu0 0.0
    %126 = vmatpush1.msra.mxu0 0.0
    %127 = vmatprep.subr.mxu0 0.0
    %128 = vmatpush1.msra.mxu0 0.0
    %129 = vmatprep.subr.mxu0 0.0
    %130 = vmatpush1.msra.mxu0 0.0
    %131 = vmatprep.subr.mxu0 0.0
    %132 = vmatpush1.msra.mxu0 0.0
    %133 = vmatprep.subr.mxu0 0.0
    %134 = vmatpush1.msra.mxu0 0.0
    %135 = vmatprep.subr.mxu0 0.0
    %136 = vmatpush1.msra.mxu0 0.0
    %137 = vmatprep.mubr.f32.mxu0 0.0
    %138 = vmatmul.mubr.f32.gmra.mrb[0].mxu0 %v71
    %v139 = vpop.f32.mrb[0].mxu0
    %v140 = vadd.f32 %v68, %v139
    %v141 = vpop.f32.mrb[0].mxu0
    %142 = vdwg.mxu0
    %v143 = vtanh.pop %v140
    %v144 = vld [vmem:[#allocation2] sm:$0xff]
    %v145 = vld [vmem:[#allocation2 + $0x8] sm:$0xff]
    %v146 = vld [vmem:[#allocation2 + $0x10] sm:$0xff]
    %v147 = vld [vmem:[#allocation2 + $0x18] sm:$0xff]
    %v148 = vld [vmem:[#allocation2 + $0x20] sm:$0xff]
    %v149 = vld [vmem:[#allocation2 + $0x28] sm:$0xff]
    %v150 = vld [vmem:[#allocation2 + $0x30] sm:$0xff]
    %v151 = vld [vmem:[#allocation2 + $0x38] sm:$0xff]
    %v152 = vld [vmem:[#allocation2 + $0x40] sm:$0xff]
    %v153 = vld [vmem:[#allocation2 + $0x48] sm:$0xff]
    %v154 = vld [vmem:[#allocation2 + $0x50] sm:$0xff]
    %v155 = vld [vmem:[#allocation2 + $0x58] sm:$0xff]
    %v156 = vld [vmem:[#allocation2 + $0x60] sm:$0xff]
    %v157 = vld [vmem:[#allocation2 + $0x68] sm:$0xff]
    %v158 = vld [vmem:[#allocation2 + $0x70] sm:$0xff]
    %v159 = vld [vmem:[#allocation2 + $0x78] sm:$0xff]
    %v160 = vlaneseq
    %v161 = vshrl.u32 %v160, 7
    %v162 = vsub.s32 0, %v161
    %v163 = vrot.slane %v62, %v162
    %164 = vmatprep.subr.mxu0 0.0
    %165 = vmatpush1.msra.mxu0 %v144
    %166 = vmatprep.subr.mxu0 0.0
    %167 = vmatpush1.msra.mxu0 %v145
    %168 = vmatprep.subr.mxu0 0.0
    %169 = vmatpush1.msra.mxu0 %v146
    %170 = vmatprep.subr.mxu0 0.0
    %171 = vmatpush1.msra.mxu0 %v147
    %172 = vmatprep.subr.mxu0 0.0
    %173 = vmatpush1.msra.mxu0 %v148
    %174 = vmatprep.subr.mxu0 0.0
    %175 = vmatpush1.msra.mxu0 %v149
    %176 = vmatprep.subr.mxu0 0.0
    %177 = vmatpush1.msra.mxu0 %v150
    %178 = vmatprep.subr.mxu0 0.0
    %179 = vmatpush1.msra.mxu0 %v151
    %180 = vmatprep.subr.mxu0 0.0
    %181 = vmatpush1.msra.mxu0 %v152
    %182 = vmatprep.subr.mxu0 0.0
    %183 = vmatpush1.msra.mxu0 %v153
    %184 = vmatprep.subr.mxu0 0.0
    %185 = vmatpush1.msra.mxu0 %v154
    %186 = vmatprep.subr.mxu0 0.0
    %187 = vmatpush1.msra.mxu0 %v155
    %188 = vmatprep.subr.mxu0 0.0
    %189 = vmatpush1.msra.mxu0 %v156
    %190 = vmatprep.subr.mxu0 0.0
    %191 = vmatpush1.msra.mxu0 %v157
    %192 = vmatprep.subr.mxu0 0.0
    %193 = vmatpush1.msra.mxu0 %v158
    %194 = vmatprep.subr.mxu0 0.0
    %195 = vmatpush1.msra.mxu0 %v159
    %196 = vmatprep.subr.mxu0 0.0
    %197 = vmatpush1.msra.mxu0 0.0
    %198 = vmatprep.subr.mxu0 0.0
    %199 = vmatpush1.msra.mxu0 0.0
    %200 = vmatprep.subr.mxu0 0.0
    %201 = vmatpush1.msra.mxu0 0.0
    %202 = vmatprep.subr.mxu0 0.0
    %203 = vmatpush1.msra.mxu0 0.0
    %204 = vmatprep.subr.mxu0 0.0
    %205 = vmatpush1.msra.mxu0 0.0
    %206 = vmatprep.subr.mxu0 0.0
    %207 = vmatpush1.msra.mxu0 0.0
    %208 = vmatprep.subr.mxu0 0.0
    %209 = vmatpush1.msra.mxu0 0.0
    %210 = vmatprep.subr.mxu0 0.0
    %211 = vmatpush1.msra.mxu0 0.0
    %212 = vmatprep.subr.mxu0 0.0
    %213 = vmatpush1.msra.mxu0 0.0
    %214 = vmatprep.subr.mxu0 0.0
    %215 = vmatpush1.msra.mxu0 0.0
    %216 = vmatprep.subr.mxu0 0.0
    %217 = vmatpush1.msra.mxu0 0.0
    %218 = vmatprep.subr.mxu0 0.0
    %219 = vmatpush1.msra.mxu0 0.0
    %220 = vmatprep.subr.mxu0 0.0
    %221 = vmatpush1.msra.mxu0 0.0
    %222 = vmatprep.subr.mxu0 0.0
    %223 = vmatpush1.msra.mxu0 0.0
    %224 = vmatprep.subr.mxu0 0.0
    %225 = vmatpush1.msra.mxu0 0.0
    %226 = vmatprep.subr.mxu0 0.0
    %227 = vmatpush1.msra.mxu0 0.0
    %228 = vmatprep.mubr.f32.mxu0 0.0
    %229 = vmatmul.mubr.f32.gmra.mrb[0].mxu0 %v143
    %v230 = vpop.f32.mrb[0].mxu0
    %v231 = vadd.f32 %v163, %v230
    %v232 = vpop.f32.mrb[0].mxu0
    %233 = vdwg.mxu0
    %v234 = vtanh.pop %v231
    %v235 = vld [vmem:[#allocation5] sm:$0xff]
    %v236 = vld [vmem:[#allocation5 + $0x8] sm:$0xff]
    %v237 = vld [vmem:[#allocation5 + $0x10] sm:$0xff]
    %v238 = vld [vmem:[#allocation5 + $0x18] sm:$0xff]
    %v239 = vld [vmem:[#allocation5 + $0x20] sm:$0xff]
    %v240 = vld [vmem:[#allocation5 + $0x28] sm:$0xff]
    %v241 = vld [vmem:[#allocation5 + $0x30] sm:$0xff]
    %v242 = vld [vmem:[#allocation5 + $0x38] sm:$0xff]
    %v243 = vld [vmem:[#allocation5 + $0x40] sm:$0xff]
    %v244 = vld [vmem:[#allocation5 + $0x48] sm:$0xff]
    %v245 = vld [vmem:[#allocation5 + $0x50] sm:$0xff]
    %v246 = vld [vmem:[#allocation5 + $0x58] sm:$0xff]
    %v247 = vld [vmem:[#allocation5 + $0x60] sm:$0xff]
    %v248 = vld [vmem:[#allocation5 + $0x68] sm:$0xff]
    %v249 = vld [vmem:[#allocation5 + $0x70] sm:$0xff]
    %v250 = vld [vmem:[#allocation5 + $0x78] sm:$0xff]
    %v251 = vlaneseq
    %v252 = vshrl.u32 %v251, 7
    %v253 = vsub.s32 0, %v252
    %v254 = vrot.slane %v63, %v253
    %255 = vmatprep.subr.mxu0 0.0
    %256 = vmatpush1.msra.mxu0 %v235
    %257 = vmatprep.subr.mxu0 0.0
    %258 = vmatpush1.msra.mxu0 %v236
    %259 = vmatprep.subr.mxu0 0.0
    %260 = vmatpush1.msra.mxu0 %v237
    %261 = vmatprep.subr.mxu0 0.0
    %262 = vmatpush1.msra.mxu0 %v238
    %263 = vmatprep.subr.mxu0 0.0
    %264 = vmatpush1.msra.mxu0 %v239
    %265 = vmatprep.subr.mxu0 0.0
    %266 = vmatpush1.msra.mxu0 %v240
    %267 = vmatprep.subr.mxu0 0.0
    %268 = vmatpush1.msra.mxu0 %v241
    %269 = vmatprep.subr.mxu0 0.0
    %270 = vmatpush1.msra.mxu0 %v242
    %271 = vmatprep.subr.mxu0 0.0
    %272 = vmatpush1.msra.mxu0 %v243
    %273 = vmatprep.subr.mxu0 0.0
    %274 = vmatpush1.msra.mxu0 %v244
    %275 = vmatprep.subr.mxu0 0.0
    %276 = vmatpush1.msra.mxu0 %v245
    %277 = vmatprep.subr.mxu0 0.0
    %278 = vmatpush1.msra.mxu0 %v246
    %279 = vmatprep.subr.mxu0 0.0
    %280 = vmatpush1.msra.mxu0 %v247
    %281 = vmatprep.subr.mxu0 0.0
    %282 = vmatpush1.msra.mxu0 %v248
    %283 = vmatprep.subr.mxu0 0.0
    %284 = vmatpush1.msra.mxu0 %v249
    %285 = vmatprep.subr.mxu0 0.0
    %286 = vmatpush1.msra.mxu0 %v250
    %287 = vmatprep.subr.mxu0 0.0
    %288 = vmatpush1.msra.mxu0 0.0
    %289 = vmatprep.subr.mxu0 0.0
    %290 = vmatpush1.msra.mxu0 0.0
    %291 = vmatprep.subr.mxu0 0.0
    %292 = vmatpush1.msra.mxu0 0.0
    %293 = vmatprep.subr.mxu0 0.0
    %294 = vmatpush1.msra.mxu0 0.0
    %295 = vmatprep.subr.mxu0 0.0
    %296 = vmatpush1.msra.mxu0 0.0
    %297 = vmatprep.subr.mxu0 0.0
    %298 = vmatpush1.msra.mxu0 0.0
    %299 = vmatprep.subr.mxu0 0.0
    %300 = vmatpush1.msra.mxu0 0.0
    %301 = vmatprep.subr.mxu0 0.0
    %302 = vmatpush1.msra.mxu0 0.0
    %303 = vmatprep.subr.mxu0 0.0
    %304 = vmatpush1.msra.mxu0 0.0
    %305 = vmatprep.subr.mxu0 0.0
    %306 = vmatpush1.msra.mxu0 0.0
    %307 = vmatprep.subr.mxu0 0.0
    %308 = vmatpush1.msra.mxu0 0.0
    %309 = vmatprep.subr.mxu0 0.0
    %310 = vmatpush1.msra.mxu0 0.0
    %311 = vmatprep.subr.mxu0 0.0
    %312 = vmatpush1.msra.mxu0 0.0
    %313 = vmatprep.subr.mxu0 0.0
    %314 = vmatpush1.msra.mxu0 0.0
    %315 = vmatprep.subr.mxu0 0.0
    %316 = vmatpush1.msra.mxu0 0.0
    %317 = vmatprep.subr.mxu0 0.0
    %318 = vmatpush1.msra.mxu0 0.0
    %319 = vmatprep.mubr.f32.mxu0 0.0
    %320 = vmatmul.mubr.f32.gmra.mrb[0].mxu0 %v234
    %v321 = vpop.f32.mrb[0].mxu0
    %v322 = vadd.f32 %v254, %v321
    %v323 = vpop.f32.mrb[0].mxu0
    %324 = vdwg.mxu0
    %325 = vst [vmem:[#allocation8] sm:$0xff] %v322
    // Predicated region
    $region34: #{policy_forward.1} parent=1 // pred_check
      _
    $region35: #{policy_forward.1} parent=1 // pred_check_branch
      %327 = sbr.rel (0) target = $region37
    $region36: #{policy_forward.1} parent=1 // pred_region
      %s329 = ssub.s32 128, 32
      %330 = vsyncadd [#allocation4], %s329
      %s331 = sshll.u32 [#allocation8], 4
      %s332 = int_to_ptr.vmem [resolvable:$true] %s331
      %337 = dma.vmem_to_hbm [thread:$0]  %s332, 32, %s5, [#allocation4], 32, 32, 2
    $region37: #{policy_forward.1} parent=1 // pred_fallthru
      _
    // Predicated region
    $region38: #{policy_forward.1} parent=1 // pred_check
      _
    $region39: #{policy_forward.1} parent=1 // pred_check_branch
      %339 = sbr.rel (0) target = $region41
    $region40: #{policy_forward.1} parent=1 // pred_region
      %340 = dma.done [#allocation4], 128
    $region41: #{policy_forward.1} parent=1 // pred_fallthru
      _
    %341 = vsyncpa [#allocation3], 1
    %342 = vsyncpa [#allocation6], 1
    %343 = vsyncpa [#allocation4], 1

</llo_original>
